<compile_context>
chip_gen: v7x
topology: tpu7x:2x2x1
jax: 0.10.0
libtpu: 0.0.40
codegen_flags: <defaults>
</compile_context>

<pallas_src>
import jax
import jax.numpy as jnp
from jax.experimental import pallas as pl
from jax.experimental.pallas import tpu as pltpu


def _round_up(v, m):
    return (v + m - 1) // m * m


def _head_kernel(x_ref, w_ref, b_ref, o_ref):
    # MXU matmul with f32 accumulation; slice the (possibly lane-padded) result down to
    # num_labels, add the bias on the VPU in f32, and store the real-width output.
    num_labels = o_ref.shape[-1]
    acc = jnp.dot(x_ref[...], w_ref[...], preferred_element_type=jnp.float32)
    acc = acc[:, :num_labels] + b_ref[...].astype(jnp.float32)
    o_ref[...] = acc.astype(o_ref.dtype)


def _pick_batch_tile(F, Lp, vmem_budget_bytes=8 * 1024 * 1024):
    # Budget covers double-buffered x blocks (tb x F) and out blocks (tb x L<=Lp), f32.
    per_row_bytes = 2 * (F + Lp) * 4
    tb = vmem_budget_bytes // per_row_bytes
    tb = max(256, min(int(tb), 8192))
    return (tb // 8) * 8  # f32 sublane alignment


def concat_head_simple(x, weight_t, bias, *, block_b=None):
    """Eval-mode ConcatHeadSimple forward.

    x:        (B, F) activations, F = layer2concat * hidden_size.
    weight_t: (F, L) = transpose of PyTorch nn.Linear weight (L, F).
    bias:     (L,) or (1, L).
    Returns (B, L).
    """
    B, F = x.shape
    F_w, L = weight_t.shape
    assert F == F_w, (F, F_w)
    bias2 = bias.reshape(1, L)

    # Lane-pad only the weight's output dim (one-time, tiny) so the MXU N dim is clean.
    Lp = _round_up(L, 128)
    if Lp != L:
        wp = jnp.zeros((F, Lp), weight_t.dtype).at[:, :L].set(weight_t)
    else:
        wp = weight_t

    tb = block_b if block_b is not None else _pick_batch_tile(F, Lp)
    tb = max(8, (int(tb) // 8) * 8)

    out_shape = jax.ShapeDtypeStruct((B, L), x.dtype)

    if B <= tb:
        # Single block: no grid / pipeline machinery; whole operands VMEM-resident.
        # Whole-array blocks are exempt from the (8,128) rule, so no padding needed.
        return pl.pallas_call(
            _head_kernel,
            out_shape=out_shape,
            in_specs=[
                pl.BlockSpec(memory_space=pltpu.MemorySpace.VMEM),
                pl.BlockSpec(memory_space=pltpu.MemorySpace.VMEM),
                pl.BlockSpec(memory_space=pltpu.MemorySpace.VMEM),
            ],
            out_specs=pl.BlockSpec(memory_space=pltpu.MemorySpace.VMEM),
        )(x, wp, bias2)

    # Grid path: stream x / out over the batch axis (ragged tail allowed via cdiv);
    # weight & bias index_maps are constant so they stay VMEM-resident across steps.
    grid = (pl.cdiv(B, tb),)
    return pl.pallas_call(
        _head_kernel,
        out_shape=out_shape,
        grid=grid,
        in_specs=[
            pl.BlockSpec((tb, F), lambda i: (i, 0)),     # x block; F is full-array dim
            pl.BlockSpec((F, Lp), lambda i: (0, 0)),     # weight resident across grid
            pl.BlockSpec((1, L), lambda i: (0, 0)),      # bias resident across grid
        ],
        out_specs=pl.BlockSpec((tb, L), lambda i: (i, 0)),  # L is full-array dim
        compiler_params=pltpu.CompilerParams(
            dimension_semantics=("parallel",),
            vmem_limit_bytes=32 * 1024 * 1024,
        ),
    )(x, wp, bias2)


if __name__ == "__main__":
    # Config consistent with the module: hidden_size=32, layer2concat=4, num_labels=5
    batch = 2
    hidden_size = 32
    layer2concat = 4
    num_labels = 5
    in_features = layer2concat * hidden_size  # 128

    key = jax.random.PRNGKey(0)
    kx, kw, kb, kx2 = jax.random.split(key, 4)

    # Input: concatenated last-4 [CLS] hidden states, shape (batch, layer2concat*hidden)
    x = jax.random.normal(kx, (batch, in_features), dtype=jnp.float32)

    # Deterministic parameter init (PyTorch nn.Linear-like uniform bound)
    bound = 1.0 / (in_features ** 0.5)
    weight = jax.random.uniform(kw, (num_labels, in_features),
                                minval=-bound, maxval=bound, dtype=jnp.float32)
    bias = jax.random.uniform(kb, (num_labels,),
                              minval=-bound, maxval=bound, dtype=jnp.float32)
    weight_t = weight.T  # (in_features, num_labels)

    # Small-batch path (no grid, whole operands VMEM-resident, output emitted directly).
    out = concat_head_simple(x, weight_t, bias)
    out = jax.block_until_ready(out)
    ref = x @ weight_t + bias[None, :]
    assert out.shape == (batch, num_labels)
    assert jnp.allclose(out, ref, atol=1e-5, rtol=1e-5)

    # Grid path with a ragged tail block (B=300, tb=128 -> 3 steps, last one partial).
    big_batch = 300
    xb = jax.random.normal(kx2, (big_batch, in_features), dtype=jnp.float32)
    out_b = concat_head_simple(xb, weight_t, bias, block_b=128)
    out_b = jax.block_until_ready(out_b)
    ref_b = xb @ weight_t + bias[None, :]
    assert out_b.shape == (big_batch, num_labels)
    assert jnp.allclose(out_b, ref_b, atol=1e-4, rtol=1e-4)

    # Grid path with the default (VMEM-budgeted) batch tile.
    out_c = concat_head_simple(xb, weight_t, bias)
    out_c = jax.block_until_ready(out_c)
    assert jnp.allclose(out_c, ref_b, atol=1e-4, rtol=1e-4)

    print("KERNEL_OK")
</pallas_src>

<mosaic_0001>
module attributes {stable_mosaic.version = 11 : i64} {
  func.func @_head_kernel(%arg0: memref<2x128xf32, #tpu.memory_space<vmem>>, %arg1: memref<128x128xf32, #tpu.memory_space<vmem>>, %arg2: memref<1x5xf32, #tpu.memory_space<vmem>>, %arg3: memref<2x5xf32, #tpu.memory_space<vmem>>) attributes {dimension_semantics = [], scalar_prefetch = 0 : i64, scratch_operands = 0 : i64, tpu.core_type = #tpu.core_type<tc>} {
    %c0 = arith.constant 0 : index
    %c0_0 = arith.constant 0 : index
    %0 = vector.load %arg0[%c0, %c0_0] : memref<2x128xf32, #tpu.memory_space<vmem>>, vector<2x128xf32>
    %c0_1 = arith.constant 0 : index
    %c0_2 = arith.constant 0 : index
    %1 = vector.load %arg1[%c0_1, %c0_2] : memref<128x128xf32, #tpu.memory_space<vmem>>, vector<128x128xf32>
    %cst = arith.constant dense<0.000000e+00> : vector<2x128xf32>
    %2 = tpu.matmul %0, %1, %cst {dimension_numbers = #tpu.dot_dimension_numbers<[1], [0], [0], [1], [0, 0, 1, 1], [], []>} : vector<2x128xf32>, vector<128x128xf32>, vector<2x128xf32> -> vector<2x128xf32>
    %3 = vector.extract_strided_slice %2 {offsets = [0, 0], sizes = [2, 5], strides = [1, 1]} : vector<2x128xf32> to vector<2x5xf32>
    %c0_3 = arith.constant 0 : index
    %c0_4 = arith.constant 0 : index
    %4 = vector.load %arg2[%c0_3, %c0_4] : memref<1x5xf32, #tpu.memory_space<vmem>>, vector<1x5xf32>
    %5 = vector.broadcast %4 : vector<1x5xf32> to vector<2x5xf32>
    %6 = arith.addf %3, %5 : vector<2x5xf32>
    %c0_5 = arith.constant 0 : index
    %c0_6 = arith.constant 0 : index
    %7 = vector.load %arg3[%c0_5, %c0_6] : memref<2x5xf32, #tpu.memory_space<vmem>>, vector<2x5xf32>
    tpu.vector_store %arg3[%c0_5, %c0_6], %6 {strides = array<i32>} : memref<2x5xf32, #tpu.memory_space<vmem>>, vector<2x5xf32>,
    return
  }
}

</mosaic_0001>

<llo_original>
// kernel: tpu_custom_call.1
$region0: #{tpu_custom_call.1}
  #allocation0 [shape = 'u32[]', space=smem, size = 0x4, offset = 0x4, fixed_abs, tag = 'smem constant byte address 0x4 - core index']
  #allocation1 [shape = 'u32[144,128]{1,0:T(1,128)}', space=vmem, size = 0x12000, scoped, tag = 'internal scratch']
  %s0 = inlined_call_operand.hbm [shape: f32[2,128], index: 0, kind: input, shape index: {}]
  %s1 = inlined_call_operand.hbm [shape: f32[128,128], index: 1, kind: input, shape index: {}]
  %s2 = inlined_call_operand.vmem [shape: f32[1,5], index: 2, kind: input, shape index: {}]
  %s3 = inlined_call_operand.hbm [shape: f32[2,5], index: 3, kind: output, shape index: {}]
  %s4 = sld [smem:[#allocation0]]
  $region30: #{tpu_custom_call.1} parent=0
    _
  %s6 = ssub.s32 1, %s4
  %s7 = scalar_select 0, %s6, %s4
  $region1: #{tpu_custom_call.1} parent=0
    #allocation2 [shape = 'u8[1024]{0}', space=vmem, size = 0x400, scoped, tag = 'input window, operand 0, single buffered']
    #allocation3 [shape = 's32[1]{0}', space=sflag, size = 0x4, scoped, tag = 'scoped memory for tpu_custom_call.1']
    #allocation4 [shape = 's32[1]{0}', space=sflag, size = 0x4, scoped, tag = 'scoped memory for tpu_custom_call.1']
    #allocation5 [shape = 'u8[65536]{0}', space=vmem, size = 0x10000, scoped, tag = 'input window, operand 1, single buffered']
    #allocation6 [shape = 's32[1]{0}', space=sflag, size = 0x4, scoped, tag = 'scoped memory for tpu_custom_call.1']
    #allocation7 [shape = 'u8[1024]{0}', space=vmem, size = 0x400, scoped, tag = 'output window, operand 0, single buffered']
    %8 = vsyncpa [#allocation3], 0
    %9 = vsyncpa [#allocation6], 0
    %10 = vsyncpa [#allocation4], 0
    // Predicated region
    $region2: #{tpu_custom_call.1} parent=1 // pred_check
      _
    $region3: #{tpu_custom_call.1} parent=1 // pred_check_branch
      %12 = sbr.rel (0) target = $region5
    $region4: #{tpu_custom_call.1} parent=1 // pred_region
      %s14 = ssub.s32 32, 32
      %15 = vsyncadd [#allocation3], %s14
      %s17 = sshll.u32 [#allocation2], 4
      %s18 = int_to_ptr.vmem [resolvable:$true] %s17
      %20 = dma.hbm_to_vmem [thread:$0]  %s0, 32, %s18, [#allocation3]
    $region5: #{tpu_custom_call.1} parent=1 // pred_fallthru
      _
    // Predicated region
    $region6: #{tpu_custom_call.1} parent=1 // pred_check
      _
    $region7: #{tpu_custom_call.1} parent=1 // pred_check_branch
      %22 = sbr.rel (0) target = $region9
    $region8: #{tpu_custom_call.1} parent=1 // pred_region
      %s24 = ssub.s32 2048, 2048
      %25 = vsyncadd [#allocation6], %s24
      %s26 = sshll.u32 [#allocation5], 4
      %s27 = int_to_ptr.vmem [resolvable:$true] %s26
      %32 = dma.hbm_to_vmem [thread:$0]  %s1, 2048, %s27, [#allocation6], 128, 128, 8
    $region9: #{tpu_custom_call.1} parent=1 // pred_fallthru
      _
    // Predicated region
    $region10: #{tpu_custom_call.1} parent=1 // pred_check
      _
    $region11: #{tpu_custom_call.1} parent=1 // pred_check_branch
      %34 = sbr.rel (0) target = $region13
    $region12: #{tpu_custom_call.1} parent=1 // pred_region
      _
    $region13: #{tpu_custom_call.1} parent=1 // pred_fallthru
      _
    // Predicated region
    $region14: #{tpu_custom_call.1} parent=1 // pred_check
      _
    $region15: #{tpu_custom_call.1} parent=1 // pred_check_branch
      %36 = sbr.rel (0) target = $region17
    $region16: #{tpu_custom_call.1} parent=1 // pred_region
      %37 = dma.done [#allocation3], 32
    $region17: #{tpu_custom_call.1} parent=1 // pred_fallthru
      _
    // Predicated region
    $region18: #{tpu_custom_call.1} parent=1 // pred_check
      _
    $region19: #{tpu_custom_call.1} parent=1 // pred_check_branch
      %39 = sbr.rel (0) target = $region21
    $region20: #{tpu_custom_call.1} parent=1 // pred_region
      %40 = dma.done [#allocation6], 2048
    $region21: #{tpu_custom_call.1} parent=1 // pred_fallthru
      _
    %v41 = vld [vmem:[#allocation2] sm:$0x3]
    %v42 = vld [vmem:[#allocation5] sm:$0xff]
    %v43 = vld [vmem:[#allocation5 + $0x8] sm:$0xff]
    %v44 = vld [vmem:[#allocation5 + $0x10] sm:$0xff]
    %v45 = vld [vmem:[#allocation5 + $0x18] sm:$0xff]
    %v46 = vld [vmem:[#allocation5 + $0x20] sm:$0xff]
    %v47 = vld [vmem:[#allocation5 + $0x28] sm:$0xff]
    %v48 = vld [vmem:[#allocation5 + $0x30] sm:$0xff]
    %v49 = vld [vmem:[#allocation5 + $0x38] sm:$0xff]
    %v50 = vld [vmem:[#allocation5 + $0x40] sm:$0xff]
    %v51 = vld [vmem:[#allocation5 + $0x48] sm:$0xff]
    %v52 = vld [vmem:[#allocation5 + $0x50] sm:$0xff]
    %v53 = vld [vmem:[#allocation5 + $0x58] sm:$0xff]
    %v54 = vld [vmem:[#allocation5 + $0x60] sm:$0xff]
    %v55 = vld [vmem:[#allocation5 + $0x68] sm:$0xff]
    %v56 = vld [vmem:[#allocation5 + $0x70] sm:$0xff]
    %v57 = vld [vmem:[#allocation5 + $0x78] sm:$0xff]
    %58 = vmatprep.subr.mxu0 0.0
    %59 = vmatpush1.msra.mxu0 %v42
    %60 = vmatprep.subr.mxu0 0.0
    %61 = vmatpush1.msra.mxu0 %v43
    %62 = vmatprep.subr.mxu0 0.0
    %63 = vmatpush1.msra.mxu0 %v44
    %64 = vmatprep.subr.mxu0 0.0
    %65 = vmatpush1.msra.mxu0 %v45
    %66 = vmatprep.subr.mxu0 0.0
    %67 = vmatpush1.msra.mxu0 %v46
    %68 = vmatprep.subr.mxu0 0.0
    %69 = vmatpush1.msra.mxu0 %v47
    %70 = vmatprep.subr.mxu0 0.0
    %71 = vmatpush1.msra.mxu0 %v48
    %72 = vmatprep.subr.mxu0 0.0
    %73 = vmatpush1.msra.mxu0 %v49
    %74 = vmatprep.subr.mxu0 0.0
    %75 = vmatpush1.msra.mxu0 %v50
    %76 = vmatprep.subr.mxu0 0.0
    %77 = vmatpush1.msra.mxu0 %v51
    %78 = vmatprep.subr.mxu0 0.0
    %79 = vmatpush1.msra.mxu0 %v52
    %80 = vmatprep.subr.mxu0 0.0
    %81 = vmatpush1.msra.mxu0 %v53
    %82 = vmatprep.subr.mxu0 0.0
    %83 = vmatpush1.msra.mxu0 %v54
    %84 = vmatprep.subr.mxu0 0.0
    %85 = vmatpush1.msra.mxu0 %v55
    %86 = vmatprep.subr.mxu0 0.0
    %87 = vmatpush1.msra.mxu0 %v56
    %88 = vmatprep.subr.mxu0 0.0
    %89 = vmatpush1.msra.mxu0 %v57
    %90 = vmatprep.subr.mxu0 0.0
    %91 = vmatpush1.msra.mxu0 0.0
    %92 = vmatprep.subr.mxu0 0.0
    %93 = vmatpush1.msra.mxu0 0.0
    %94 = vmatprep.subr.mxu0 0.0
    %95 = vmatpush1.msra.mxu0 0.0
    %96 = vmatprep.subr.mxu0 0.0
    %97 = vmatpush1.msra.mxu0 0.0
    %98 = vmatprep.subr.mxu0 0.0
    %99 = vmatpush1.msra.mxu0 0.0
    %100 = vmatprep.subr.mxu0 0.0
    %101 = vmatpush1.msra.mxu0 0.0
    %102 = vmatprep.subr.mxu0 0.0
    %103 = vmatpush1.msra.mxu0 0.0
    %104 = vmatprep.subr.mxu0 0.0
    %105 = vmatpush1.msra.mxu0 0.0
    %106 = vmatprep.subr.mxu0 0.0
    %107 = vmatpush1.msra.mxu0 0.0
    %108 = vmatprep.subr.mxu0 0.0
    %109 = vmatpush1.msra.mxu0 0.0
    %110 = vmatprep.subr.mxu0 0.0
    %111 = vmatpush1.msra.mxu0 0.0
    %112 = vmatprep.subr.mxu0 0.0
    %113 = vmatpush1.msra.mxu0 0.0
    %114 = vmatprep.subr.mxu0 0.0
    %115 = vmatpush1.msra.mxu0 0.0
    %116 = vmatprep.subr.mxu0 0.0
    %117 = vmatpush1.msra.mxu0 0.0
    %118 = vmatprep.subr.mxu0 0.0
    %119 = vmatpush1.msra.mxu0 0.0
    %120 = vmatprep.subr.mxu0 0.0
    %121 = vmatpush1.msra.mxu0 0.0
    %122 = vmatprep.mubr.f32.mxu0 0.0
    %123 = vmatmul.mubr.f32.gmra.mrb[0].mxu0 %v41
    %v124 = vpop.f32.mrb[0].mxu0
    %v125 = vadd.f32 0.0, %v124
    %v126 = vpop.f32.mrb[0].mxu0
    %127 = vdwg.mxu0
    %v128 = vld [vmem:[%s2] sm:$0x1]
    %v130 = vlaneseq
    %v131 = vshrl.u32 %v130, 7
    %v132 = vsub.s32 0, %v131
    %v133 = vrot.slane %v128, %v132
    %v135 = vadd.f32 %v125, %v133
    %vm136 = vcmask 33792
    %137 = vst.msk [vmem:[#allocation7] sm:$0x3] %vm136, %v135
    // Predicated region
    $region22: #{tpu_custom_call.1} parent=1 // pred_check
      _
    $region23: #{tpu_custom_call.1} parent=1 // pred_check_branch
      %139 = sbr.rel (0) target = $region25
    $region24: #{tpu_custom_call.1} parent=1 // pred_region
      %s141 = ssub.s32 32, 32
      %142 = vsyncadd [#allocation4], %s141
      %s144 = sshll.u32 [#allocation7], 4
      %s145 = int_to_ptr.vmem [resolvable:$true] %s144
      %147 = dma.vmem_to_hbm [thread:$0]  %s145, 32, %s3, [#allocation4]
    $region25: #{tpu_custom_call.1} parent=1 // pred_fallthru
      _
    // Predicated region
    $region26: #{tpu_custom_call.1} parent=1 // pred_check
      _
    $region27: #{tpu_custom_call.1} parent=1 // pred_check_branch
      %149 = sbr.rel (0) target = $region29
    $region28: #{tpu_custom_call.1} parent=1 // pred_region
      %150 = dma.done [#allocation4], 32
    $region29: #{tpu_custom_call.1} parent=1 // pred_fallthru
      _
    %151 = vsyncpa [#allocation3], 1
    %152 = vsyncpa [#allocation6], 1
    %153 = vsyncpa [#allocation4], 1

</llo_original>
